<compile_context>
chip_gen: v5e
topology: v5e:2x2
jax: 0.10.0
libtpu: 0.0.40
codegen_flags: <defaults>
</compile_context>

<pallas_src>
import jax
import jax.numpy as jnp
from jax.experimental import pallas as pl
from jax.experimental.pallas import tpu as pltpu


def _softmax_loss_kernel(pos_ref, neg1_ref, neg2_ref, loss_ref):
    # One batch tile: pos [TB,1], neg1/neg2 [TB,N] (input dtype), loss [TB,1].
    neg1 = neg1_ref[...]                                   # [TB, N], input dtype
    neg2 = neg2_ref[...]                                   # [TB, N], input dtype

    # Row max in the input dtype (max is exact in bf16), upcast the [TB,1]
    # result only.  Avoids two [TB,N] f32 temporaries.
    max1 = jnp.max(neg1, axis=1, keepdims=True).astype(jnp.float32)   # [TB,1]
    max2 = jnp.max(neg2, axis=1, keepdims=True).astype(jnp.float32)   # [TB,1]

    # Fold the f32 upcast into the fused sub/exp/sum so cast/sub/exp stream
    # per-vreg into the row reduction (exp accumulation stays in f32).
    den1 = jnp.sum(jnp.exp(neg1.astype(jnp.float32) - max1),
                   axis=-1, keepdims=True)                             # [TB,1]
    den2 = jnp.sum(jnp.exp(neg2.astype(jnp.float32) - max2),
                   axis=-1, keepdims=True)                             # [TB,1]

    pos = pos_ref[...].astype(jnp.float32)                             # [TB,1]

    # losses = 2*pos - max1 - max2 - log(den1) - log(den2)
    # fused:  log(den1) + log(den2) == log(den1 * den2)   (one EUP log / row)
    losses = 2.0 * pos - max1 - max2 - jnp.log(den1 * den2)            # [TB,1]

    loss_ref[...] = losses.astype(loss_ref.dtype)


def _vmem_capacity_bytes():
    """Physical VMEM of the current chip; conservative fallback if unknown."""
    try:
        return int(pltpu.get_tpu_info().vmem_capacity_bytes)
    except Exception:
        return 64 * 1024 * 1024       # safe (v7x-sized) fallback


def _pick_tiling(B, N, in_itemsize):
    """Generation-aware batch-tile height TB and scoped-VMEM limit."""
    vmem_cap = _vmem_capacity_bytes()
    if vmem_cap >= 96 * 1024 * 1024:            # v5e / v6e: 128 MiB physical
        budget_bytes = 24 * 1024 * 1024         # pipeline + temporaries budget
        vmem_limit_bytes = 96 * 1024 * 1024
    else:                                        # v7x-class: 64 MiB physical
        budget_bytes = 11 * 1024 * 1024
        vmem_limit_bytes = 48 * 1024 * 1024

    # Per batch-row working set:
    #   2 negatives x 2 pipeline buffers in the input dtype   (4*itemsize*N)
    #   ~1 f32 temporary per negative for the exp/sum chain   (8*N)
    #   positive (2 bufs) + f32 output (2 bufs)                (~32 B)
    per_row_bytes = N * (4 * in_itemsize + 8) + 32
    tb = max(8, int(budget_bytes // per_row_bytes))

    if 8 * per_row_bytes > vmem_limit_bytes:
        # Even an 8-row tile over-commits VMEM; needs the flash-style N-tiled
        # variant (see TODO at the top).  Fail loudly rather than spill/fault.
        raise ValueError(
            f"softmax_loss: N={N} too large for a single-row-tile kernel "
            f"({8 * per_row_bytes} B > {vmem_limit_bytes} B VMEM limit)")

    if tb >= B:
        tb = B                                   # full extent: always legal
        if B >= 16:
            # Guarantee >= 2 grid steps so the "parallel" batch axis can be
            # sharded across both TensorCores on v7x (one extra ~0.35us
            # pipeline step elsewhere -- noise).
            tb = min(B, ((pl.cdiv(B, 2) + 7) // 8) * 8)
    else:
        tb = max(8, (tb // 8) * 8)               # 2nd-to-last block dim % 8 == 0

    return tb, vmem_limit_bytes


def softmax_loss(positive, negative_1, negative_2, *, block_rows=None):
    """positive: [B, 1]; negative_1, negative_2: [B, N] -> scalar f32."""
    B, N = negative_1.shape
    assert positive.shape == (B, 1)
    assert negative_2.shape == (B, N)

    in_itemsize = jnp.dtype(negative_1.dtype).itemsize
    tb, vmem_limit = _pick_tiling(B, N, in_itemsize)
    if block_rows is not None:
        tb = block_rows
    grid = (pl.cdiv(B, tb),)

    per_row_losses = pl.pallas_call(
        _softmax_loss_kernel,
        out_shape=jax.ShapeDtypeStruct((B, 1), jnp.float32),
        grid=grid,
        in_specs=[
            pl.BlockSpec((tb, 1), lambda i: (i, 0)),    # positive
            pl.BlockSpec((tb, N), lambda i: (i, 0)),    # negative_1
            pl.BlockSpec((tb, N), lambda i: (i, 0)),    # negative_2
        ],
        out_specs=pl.BlockSpec((tb, 1), lambda i: (i, 0)),
        compiler_params=pltpu.CompilerParams(
            dimension_semantics=("parallel",),          # independent batch tiles
            vmem_limit_bytes=vmem_limit,
        ),
    )(positive, negative_1, negative_2)

    # -losses.mean(); padded tail rows of a partial last block are never
    # written (OOB output writes are dropped), so the mean sees exactly B rows.
    return -jnp.mean(per_row_losses)


def _reference(positive, negative_1, negative_2):
    p = positive.astype(jnp.float32)
    n1 = negative_1.astype(jnp.float32)
    n2 = negative_2.astype(jnp.float32)
    max1 = jnp.max(n1, axis=1, keepdims=True)
    max2 = jnp.max(n2, axis=1, keepdims=True)
    den1 = jnp.sum(jnp.exp(n1 - max1), axis=-1, keepdims=True)
    den2 = jnp.sum(jnp.exp(n2 - max2), axis=-1, keepdims=True)
    losses = 2 * p - max1 - max2 - jnp.log(den1) - jnp.log(den2)
    return -jnp.mean(losses)


if __name__ == "__main__":
    key = jax.random.PRNGKey(0)

    # Case 1: small tile-friendly f32 shapes (single tile).
    kp, k1, k2, key = jax.random.split(key, 4)
    B, N = 8, 128
    positive = jax.random.normal(kp, (B, 1), dtype=jnp.float32)
    negative_1 = jax.random.normal(k1, (B, N), dtype=jnp.float32)
    negative_2 = jax.random.normal(k2, (B, N), dtype=jnp.float32)
    out = jax.block_until_ready(softmax_loss(positive, negative_1, negative_2))
    ref = _reference(positive, negative_1, negative_2)
    assert jnp.allclose(out, ref, rtol=1e-5, atol=1e-5), (out, ref)

    # Case 2: bf16 inputs, B not a multiple of the tile -> >=2 tiles with a
    # partial tail block (exercises multi-tile + dropped OOB rows).
    kp, k1, k2, key = jax.random.split(key, 4)
    B, N = 20, 256
    positive = jax.random.normal(kp, (B, 1), dtype=jnp.bfloat16)
    negative_1 = jax.random.normal(k1, (B, N), dtype=jnp.bfloat16)
    negative_2 = jax.random.normal(k2, (B, N), dtype=jnp.bfloat16)
    out = jax.block_until_ready(softmax_loss(positive, negative_1, negative_2))
    ref = _reference(positive, negative_1, negative_2)
    assert jnp.allclose(out, ref, rtol=1e-3, atol=1e-3), (out, ref)

    print("KERNEL_OK")
</pallas_src>

<mosaic_0001>
module attributes {stable_mosaic.version = 11 : i64} {
  func.func @_softmax_loss_kernel(%arg0: i32, %arg1: memref<8x1xf32, #tpu.memory_space<vmem>>, %arg2: memref<8x128xf32, #tpu.memory_space<vmem>>, %arg3: memref<8x128xf32, #tpu.memory_space<vmem>>, %arg4: memref<8x1xf32, #tpu.memory_space<vmem>>) attributes {dimension_semantics = [#tpu.dimension_semantics<parallel>], iteration_bounds = array<i64: 1>, scalar_prefetch = 0 : i64, scratch_operands = 0 : i64, tpu.core_type = #tpu.core_type<tc>, window_params = [{transform_indices = @transform_0, window_bounds = array<i64: 8, 1>}, {transform_indices = @transform_1, window_bounds = array<i64: 8, 128>}, {transform_indices = @transform_2, window_bounds = array<i64: 8, 128>}, {transform_indices = @transform_3, window_bounds = array<i64: 8, 1>}]} {
    %c0 = arith.constant 0 : index
    %c0_0 = arith.constant 0 : index
    %0 = vector.load %arg2[%c0, %c0_0] : memref<8x128xf32, #tpu.memory_space<vmem>>, vector<8x128xf32>
    %c0_1 = arith.constant 0 : index
    %c0_2 = arith.constant 0 : index
    %1 = vector.load %arg3[%c0_1, %c0_2] : memref<8x128xf32, #tpu.memory_space<vmem>>, vector<8x128xf32>
    %cst = arith.constant dense<0xFF800000> : vector<8xf32>
    %2 = vector.multi_reduction <maximumf>, %0, %cst [1] : vector<8x128xf32> to vector<8xf32>
    %3 = vector.shape_cast %2 : vector<8xf32> to vector<8x1xf32>
    %cst_3 = arith.constant dense<0xFF800000> : vector<8xf32>
    %4 = vector.multi_reduction <maximumf>, %1, %cst_3 [1] : vector<8x128xf32> to vector<8xf32>
    %5 = vector.shape_cast %4 : vector<8xf32> to vector<8x1xf32>
    %6 = vector.broadcast %3 : vector<8x1xf32> to vector<8x128xf32>
    %7 = arith.subf %0, %6 : vector<8x128xf32>
    %8 = math.exp %7 : vector<8x128xf32>
    %cst_4 = arith.constant dense<0.000000e+00> : vector<8xf32>
    %9 = vector.multi_reduction <add>, %8, %cst_4 [1] : vector<8x128xf32> to vector<8xf32>
    %10 = vector.shape_cast %9 : vector<8xf32> to vector<8x1xf32>
    %11 = vector.broadcast %5 : vector<8x1xf32> to vector<8x128xf32>
    %12 = arith.subf %1, %11 : vector<8x128xf32>
    %13 = math.exp %12 : vector<8x128xf32>
    %cst_5 = arith.constant dense<0.000000e+00> : vector<8xf32>
    %14 = vector.multi_reduction <add>, %13, %cst_5 [1] : vector<8x128xf32> to vector<8xf32>
    %15 = vector.shape_cast %14 : vector<8xf32> to vector<8x1xf32>
    %c0_6 = arith.constant 0 : index
    %c0_7 = arith.constant 0 : index
    %16 = vector.load %arg1[%c0_6, %c0_7] : memref<8x1xf32, #tpu.memory_space<vmem>>, vector<8x1xf32>
    %cst_8 = arith.constant 2.000000e+00 : f32
    %17 = vector.broadcast %cst_8 : f32 to vector<8x1xf32>
    %18 = arith.mulf %17, %16 : vector<8x1xf32>
    %19 = arith.subf %18, %3 : vector<8x1xf32>
    %20 = arith.subf %19, %5 : vector<8x1xf32>
    %21 = arith.mulf %10, %15 : vector<8x1xf32>
    %22 = math.log %21 : vector<8x1xf32>
    %23 = arith.subf %20, %22 : vector<8x1xf32>
    %c0_9 = arith.constant 0 : index
    %c0_10 = arith.constant 0 : index
    %24 = vector.load %arg4[%c0_9, %c0_10] : memref<8x1xf32, #tpu.memory_space<vmem>>, vector<8x1xf32>
    tpu.vector_store %arg4[%c0_9, %c0_10], %23 {strides = array<i32>} : memref<8x1xf32, #tpu.memory_space<vmem>>, vector<8x1xf32>,
    return
  }
  func.func @transform_0(%arg0: i32) -> (i32, i32) {
    %c0_i32 = arith.constant 0 : i32
    %c0_i32_0 = arith.constant 0 : i32
    return %arg0, %c0_i32 : i32, i32
  }
  func.func @transform_1(%arg0: i32) -> (i32, i32) {
    %c0_i32 = arith.constant 0 : i32
    %c0_i32_0 = arith.constant 0 : i32
    return %arg0, %c0_i32 : i32, i32
  }
  func.func @transform_2(%arg0: i32) -> (i32, i32) {
    %c0_i32 = arith.constant 0 : i32
    %c0_i32_0 = arith.constant 0 : i32
    return %arg0, %c0_i32 : i32, i32
  }
  func.func @transform_3(%arg0: i32) -> (i32, i32) {
    %c0_i32 = arith.constant 0 : i32
    %c0_i32_0 = arith.constant 0 : i32
    return %arg0, %c0_i32 : i32, i32
  }
}

</mosaic_0001>

<llo_original>
// kernel: tpu_custom_call.1
$region0: #{tpu_custom_call.1}
  #allocation0 [shape = 'u32[]', space=smem, size = 0x4, offset = 0x4, fixed_abs, tag = 'smem constant byte address 0x4 - core index']
  #allocation1 [shape = 'u32[72,128]{1,0:T(1,128)}', space=vmem, size = 0x9000, scoped, tag = 'internal scratch']
  %s0 = inlined_call_operand.vmem [shape: f32[8,1], index: 0, kind: input, shape index: {}]
  %s1 = inlined_call_operand.vmem [shape: f32[8,128], index: 1, kind: input, shape index: {}]
  %s2 = inlined_call_operand.hbm [shape: f32[8,128], index: 2, kind: input, shape index: {}]
  %s3 = inlined_call_operand.vmem [shape: f32[8,1], index: 3, kind: output, shape index: {}]
  %s4 = sld [smem:[#allocation0]]
  $region26: #{tpu_custom_call.1} parent=0
    _
  %s6 = ssub.s32 1, %s4
  %s7 = scalar_select 0, %s6, %s4
  $region1: #{tpu_custom_call.1} parent=0
    #allocation2 [shape = 'u8[4096]{0}', space=vmem, size = 0x1000, scoped, tag = 'input window, operand 2, single buffered']
    #allocation3 [shape = 's32[1]{0}', space=sflag, size = 0x4, scoped, tag = 'scoped memory for tpu_custom_call.1']
    %8 = vsyncpa [#allocation3], 0
    // Predicated region
    $region2: #{tpu_custom_call.1} parent=1 // pred_check
      _
    $region3: #{tpu_custom_call.1} parent=1 // pred_check_branch
      %10 = sbr.rel (0) target = $region5
    $region4: #{tpu_custom_call.1} parent=1 // pred_region
      _
    $region5: #{tpu_custom_call.1} parent=1 // pred_fallthru
      _
    // Predicated region
    $region6: #{tpu_custom_call.1} parent=1 // pred_check
      _
    $region7: #{tpu_custom_call.1} parent=1 // pred_check_branch
      %12 = sbr.rel (0) target = $region9
    $region8: #{tpu_custom_call.1} parent=1 // pred_region
      _
    $region9: #{tpu_custom_call.1} parent=1 // pred_fallthru
      _
    // Predicated region
    $region10: #{tpu_custom_call.1} parent=1 // pred_check
      _
    $region11: #{tpu_custom_call.1} parent=1 // pred_check_branch
      %14 = sbr.rel (0) target = $region13
    $region12: #{tpu_custom_call.1} parent=1 // pred_region
      %16 = vsyncadd [#allocation3], 0
      %s18 = sshll.u32 %s2, 4
      %s19 = int_to_ptr.hbm [resolvable:$true] %s18
      %s20 = sshll.u32 [#allocation2], 4
      %s21 = int_to_ptr.vmem [resolvable:$true] %s20
      %23 = dma.hbm_to_vmem [thread:$0]  %s19, 128, %s21, [#allocation3]
    $region13: #{tpu_custom_call.1} parent=1 // pred_fallthru
      _
    // Predicated region
    $region14: #{tpu_custom_call.1} parent=1 // pred_check
      _
    $region15: #{tpu_custom_call.1} parent=1 // pred_check_branch
      %25 = sbr.rel (0) target = $region17
    $region16: #{tpu_custom_call.1} parent=1 // pred_region
      %27 = dma.done [#allocation3], 128
    $region17: #{tpu_custom_call.1} parent=1 // pred_fallthru
      _
    %v28 = vld [vmem:[%s1] sm:$0xff]
    %v29 = vld [vmem:[#allocation2] sm:$0xff]
    %30 = vmax.xlane.f32.xlu0 %v28
    %v31 = vpop.xlane.xlu0 %30
    %32 = vmax.xlane.f32.xlu0 %v29
    %v33 = vpop.xlane.xlu0 %32
    %v34 = vsub.f32 %v28, %v31
    %v35 = vmul.f32 %v34, 1.442695
    %v36 = vpow.pop %v35
    %37 = vadd.xlane.f32.xlu0 %v36
    %v38 = vpop.xlane.xlu0 %37
    %v39 = vsub.f32 %v29, %v33
    %v40 = vmul.f32 %v39, 1.442695
    %v41 = vpow.pop %v40
    %42 = vadd.xlane.f32.xlu0 %v41
    %v43 = vpop.xlane.xlu0 %42
    %v44 = vld [vmem:[%s0] sm:$0xff]
    %v45 = vmul.f32 %v44, 2.0
    %v46 = vsub.f32 %v45, %v31
    %v47 = vsub.f32 %v46, %v33
    %v48 = vmul.f32 %v38, %v43
    %v49 = vlog2.pop %v48
    %v50 = vmul.f32 %v49, 0.6931472
    %v51 = vsub.f32 %v47, %v50
    %vm52 = vcmask 7168
    %53 = vst.msk [vmem:[%s3] sm:$0xff] %vm52, %v51
    // Predicated region
    $region18: #{tpu_custom_call.1} parent=1 // pred_check
      _
    $region19: #{tpu_custom_call.1} parent=1 // pred_check_branch
      %55 = sbr.rel (0) target = $region21
    $region20: #{tpu_custom_call.1} parent=1 // pred_region
      _
    $region21: #{tpu_custom_call.1} parent=1 // pred_fallthru
      _
    // Predicated region
    $region22: #{tpu_custom_call.1} parent=1 // pred_check
      _
    $region23: #{tpu_custom_call.1} parent=1 // pred_check_branch
      %57 = sbr.rel (0) target = $region25
    $region24: #{tpu_custom_call.1} parent=1 // pred_region
      _
    $region25: #{tpu_custom_call.1} parent=1 // pred_fallthru
      _
    %58 = vsyncpa [#allocation3], 1

</llo_original>
